<compile_context>
chip_gen: v7x
topology: tpu7x:2x2x1
jax: 0.10.0
libtpu: 0.0.40
codegen_flags: <defaults>
</compile_context>

<pallas_src>
import functools
import math

import jax
import jax.numpy as jnp
import numpy as np
from jax.experimental import pallas as pl
from jax.experimental.pallas import tpu as pltpu


def _lrelu(v):
    # nn.LeakyReLU(0.2)
    return jnp.where(v > 0, v, 0.2 * v)


def _dgcn_kernel(x_ref, tc_ref, an_ref, ws_ref, wx_ref, wd_ref, *out_refs, mm_dtype):
    """Fused static-GCN -> dynamic-adjacency -> dynamic-GCN for a block of Bb batches."""
    f32 = jnp.float32
    Bb, N, C = x_ref.shape
    Cout = out_refs[0].shape[-1]

    x3 = x_ref[...]            # (Bb, N, C)   node-major features
    tc = tc_ref[...]           # (Bb, 1, N)   precomputed connect-vec + bias term (m last)
    A_n = an_ref[...]          # (N, N)       precomputed  D A^T D  (normalized static adj)
    Ws = ws_ref[...]           # (C, C)       static_weight
    Wx = wx_ref[...]           # (N, C)       feature half of conv_create_co_mat weight
    Wd = wd_ref[...]           # (C, Cout)    dynamic_weight

    def mm(a, b):              # (M, K) @ (K, N), f32 accumulate on the MXU
        return jax.lax.dot_general(
            a.astype(mm_dtype), b.astype(mm_dtype),
            dimension_numbers=(((1,), (0,)), ((), ())),
            preferred_element_type=f32)

    def mm_t(a, b):            # (M, K) @ (N, K)^T without materializing a transpose
        return jax.lax.dot_general(
            a.astype(mm_dtype), b.astype(mm_dtype),
            dimension_numbers=(((1,), (1,)), ((), ())),
            preferred_element_type=f32)

    def bmm(a, b):             # (Bb, M, K) @ (Bb, K, N) batched on the MXU
        return jax.lax.dot_general(
            a.astype(mm_dtype), b.astype(mm_dtype),
            dimension_numbers=(((2,), (1,)), ((0,), (0,))),
            preferred_element_type=f32)

    # ---- static GCN --------------------------------------------------------
    h3 = _lrelu(bmm(jnp.broadcast_to(A_n, (Bb, N, N)), x3))        # (Bb, N, C)
    x2 = x3.reshape(Bb * N, C)
    xn2 = x2 + mm(h3.reshape(Bb * N, C), Ws)                       # x + out_static, flat slab
    xn3 = xn2.reshape(Bb, N, C)

    # ---- dynamic adjacency (transposed layout: dadjT[b, n, m] == dadj[b, m, n]) --------
    txT = mm_t(xn2, Wx).reshape(Bb, N, N)                          # [b, n, m]
    dadjT = jax.nn.sigmoid(txT + tc)                               # tc broadcasts over n
    if len(out_refs) > 1:                                          # only when prob/gap need it
        out_refs[1][...] = dadjT

    # ---- dynamic GCN -------------------------------------------------------
    # rowsum_n dadj[b, m, n] == sum over axis 1 of dadjT; sigmoid > 0 so rsqrt is safe.
    d2 = jax.lax.rsqrt(jnp.sum(dadjT, axis=1))                     # (Bb, N)
    adj2 = (d2[:, :, None] * dadjT) * d2[:, None, :]               # D2 dadj^T D2, per batch
    h2 = _lrelu(bmm(adj2, xn3))                                    # (Bb, N, C)
    y = _lrelu(mm(h2.reshape(Bb * N, C), Wd))                      # (Bb*N, Cout)
    out_refs[0][...] = y.reshape(Bb, N, Cout)


def _pick_batch_block(B, N, C, Cout, budget_bytes=24 * 1024 * 1024):
    """Largest divisor of B whose per-step working set fits a conservative VMEM budget.

    Budget is sized for v7x (64 MiB physical / 32 MiB default scoped VMEM), the tightest
    generation; the same choice then also fits comfortably on v5e/v6e (128 MiB).
    """
    per_b = 4 * (2 * N * C + 2 * N + 2 * N * Cout + 2 * N * N     # double-buffered blocks
                 + 6 * N * C + 4 * N * N + N * Cout)              # live in-kernel temporaries
    cap = max(1, budget_bytes // max(per_b, 1))
    bb = 1
    for d in range(1, B + 1):
        if B % d == 0 and d <= cap:
            bb = d
    # keep >= 2 grid steps when possible so the parallel batch axis can use both v7x cores
    if B // bb < 2 and bb % 2 == 0:
        bb //= 2
    return max(bb, 1)


def dgcn_forward(x, connect_vec, out1, params, prob=False, gap=False,
                 matmul_dtype=jnp.float32):
    """JAX wrapper reproducing DynamicGraphConvolution.forward -> (out, dynamic_adj_loss)."""
    B, N, C = x.shape
    Cout = params["dynamic_weight"].shape[1]
    f32 = jnp.float32

    # ---- batch-invariant precompute, hoisted out of the kernel --------------------------
    A = params["static_adj"].astype(f32)
    # gen_adj(A) = D A^T D, D = diag(rowsum(A)^-0.5).  Tiny clamp guards all-zero rows
    # (PyTorch's pow(-0.5) would produce inf there); no effect for positive rowsums.
    d = jax.lax.rsqrt(jnp.maximum(jnp.sum(A, axis=1), 1e-12))
    A_norm = (d[:, None] * A.T) * d[None, :]                              # (N, N)
    # connect-vec half of the 1x1 conv + bias: depends only on inputs, compute once here.
    tc = connect_vec.astype(f32) @ params["W_cv"].T.astype(f32) \
        + params["bias"][:, 0][None, :]                                   # (B, N), index m
    tc3 = tc[:, None, :]                                                  # (B, 1, N)

    emit_adj = bool(prob or gap)
    Bb = _pick_batch_block(B, N, C, Cout)
    grid = (B // Bb,)

    out_shapes = [jax.ShapeDtypeStruct((B, N, Cout), f32)]
    out_specs = [pl.BlockSpec((Bb, N, Cout), lambda b: (b, 0, 0))]
    if emit_adj:
        out_shapes.append(jax.ShapeDtypeStruct((B, N, N), f32))
        out_specs.append(pl.BlockSpec((Bb, N, N), lambda b: (b, 0, 0)))

    kernel = functools.partial(_dgcn_kernel, mm_dtype=matmul_dtype)
    results = pl.pallas_call(
        kernel,
        out_shape=tuple(out_shapes),
        grid=grid,
        in_specs=[
            pl.BlockSpec((Bb, N, C), lambda b: (b, 0, 0)),    # x block (node-major)
            pl.BlockSpec((Bb, 1, N), lambda b: (b, 0, 0)),    # connect-vec + bias term
            pl.BlockSpec((N, N), lambda b: (0, 0)),           # normalized static adj (resident)
            pl.BlockSpec((C, C), lambda b: (0, 0)),           # static_weight (resident)
            pl.BlockSpec((N, C), lambda b: (0, 0)),           # W_x (resident)
            pl.BlockSpec((C, Cout), lambda b: (0, 0)),        # dynamic_weight (resident)
        ],
        out_specs=tuple(out_specs),
        compiler_params=pltpu.CompilerParams(dimension_semantics=("parallel",)),
    )(x.astype(f32), tc3, A_norm, params["static_weight"].astype(f32),
      params["W_x"].astype(f32), params["dynamic_weight"].astype(f32))

    if emit_adj:
        out_nodes, dadjT = results
    else:
        out_nodes = results[0] if isinstance(results, (tuple, list)) else results
        dadjT = None

    out = jnp.transpose(out_nodes, (0, 2, 1))     # (B, C_out, N), as in PyTorch

    # loss terms (tiny glue; written against the transposed adjacency -> no transpose needed)
    num_classes = out1.shape[1]
    loss = jnp.float32(0.0)
    if prob:
        transformed = jnp.einsum("bm,bnm->bn", out1.astype(f32), dadjT) / num_classes
        loss = loss + jnp.sum(jnp.sqrt(jnp.sum((out1 - transformed) ** 2, axis=1)))
    if gap:
        diffT = dadjT - A.T[None]                 # ||dadj - A||_F == ||dadjT - A^T||_F
        loss = loss + jnp.sum(
            jnp.sqrt(jnp.sum(diffT.reshape(B, -1) ** 2, axis=1))) / num_classes
    return out, loss


def reference_forward(x, connect_vec, out1, p, prob=False, gap=False):
    """Pure-JAX mirror of the PyTorch forward (for verification)."""
    A = p["static_adj"]
    d = jnp.power(jnp.sum(A, axis=1), -0.5)
    D = jnp.diag(d)
    adj = (A @ D).T @ D
    h = jnp.einsum("ij,bjc->bic", adj, x)
    h = _lrelu(h)
    xn = x + jnp.einsum("bic,cd->bid", h, p["static_weight"])

    term_x = jnp.einsum("mc,bnc->bmn", p["W_x"], xn)
    term_c = jnp.einsum("mc,bc->bm", p["W_cv"], connect_vec)
    dadj = jax.nn.sigmoid(term_x + term_c[:, :, None] + p["bias"][None, :, :])

    d2 = jnp.power(jnp.sum(dadj, axis=2), -0.5)
    adjs = d2[:, :, None] * jnp.transpose(dadj, (0, 2, 1)) * d2[:, None, :]
    h2 = _lrelu(jnp.einsum("bij,bjc->bic", adjs, xn))
    y = _lrelu(jnp.einsum("bic,cd->bid", h2, p["dynamic_weight"]))
    out = jnp.transpose(y, (0, 2, 1))

    num_classes = out1.shape[1]
    loss = jnp.float32(0.0)
    if prob:
        transformed = jnp.matmul(out1[:, None, :], dadj)[:, 0, :] / num_classes
        loss = loss + jnp.sum(jnp.sqrt(jnp.sum((out1 - transformed) ** 2, axis=1)))
    if gap:
        diff = dadj - A[None]
        loss = loss + jnp.sum(
            jnp.sqrt(jnp.sum(diff.reshape(diff.shape[0], -1) ** 2, axis=1))
        ) / num_classes
    return out, loss


if __name__ == "__main__":
    B, N, C_in, C_out = 4, 8, 32, 32   # N = num_nodes = num_classes

    key = jax.random.PRNGKey(0)
    k = jax.random.split(key, 9)

    static_stdv = 1.0 / math.sqrt(C_in)
    dynamic_stdv = 1.0 / math.sqrt(C_out)
    conv_bound = 1.0 / math.sqrt(2 * C_in)

    params = {
        # adjList provided, constraint=False -> static_adj holds adjList directly
        "static_adj": jax.random.uniform(k[0], (N, N), jnp.float32, 0.05, 1.0),
        "static_weight": jax.random.uniform(k[1], (C_in, C_in), jnp.float32,
                                            -static_stdv, static_stdv),
        "dynamic_weight": jax.random.uniform(k[2], (C_in, C_out), jnp.float32,
                                             -dynamic_stdv, dynamic_stdv),
        # conv_create_co_mat = Conv1d(2*C_in, N, 1): weight split into the two
        # concatenated halves [connect_vec ; x]
        "W_cv": jax.random.uniform(k[3], (N, C_in), jnp.float32, -conv_bound, conv_bound),
        "W_x": jax.random.uniform(k[4], (N, C_in), jnp.float32, -conv_bound, conv_bound),
        "bias": jax.random.uniform(k[5], (N, 1), jnp.float32, -conv_bound, conv_bound),
    }

    x = jax.random.normal(k[6], (B, N, C_in), jnp.float32)
    connect_vec = jax.random.normal(k[7], (B, C_in), jnp.float32)
    out1 = jax.random.normal(k[8], (B, N), jnp.float32)

    # 1) both loss terms requested -> kernel also emits the dynamic adjacency
    out, loss = dgcn_forward(x, connect_vec, out1, params, prob=True, gap=True)
    out, loss = jax.block_until_ready((out, loss))
    ref_out, ref_loss = reference_forward(x, connect_vec, out1, params, prob=True, gap=True)
    np.testing.assert_allclose(np.asarray(out), np.asarray(ref_out), rtol=1e-4, atol=1e-4)
    np.testing.assert_allclose(np.asarray(loss), np.asarray(ref_loss), rtol=1e-4, atol=1e-4)

    # 2) no loss terms -> single-output kernel, no adjacency HBM writeback
    out2, loss2 = dgcn_forward(x, connect_vec, out1, params, prob=False, gap=False)
    out2, loss2 = jax.block_until_ready((out2, loss2))
    np.testing.assert_allclose(np.asarray(out2), np.asarray(ref_out), rtol=1e-4, atol=1e-4)
    np.testing.assert_allclose(np.asarray(loss2), 0.0, atol=1e-7)

    print("KERNEL_OK")
</pallas_src>

<mosaic_0001>
module attributes {stable_mosaic.version = 11 : i64} {
  func.func @_dgcn_kernel(%arg0: i32, %arg1: memref<2x8x32xf32, #tpu.memory_space<vmem>>, %arg2: memref<2x1x8xf32, #tpu.memory_space<vmem>>, %arg3: memref<8x8xf32, #tpu.memory_space<vmem>>, %arg4: memref<32x32xf32, #tpu.memory_space<vmem>>, %arg5: memref<8x32xf32, #tpu.memory_space<vmem>>, %arg6: memref<32x32xf32, #tpu.memory_space<vmem>>, %arg7: memref<2x8x32xf32, #tpu.memory_space<vmem>>, %arg8: memref<2x8x8xf32, #tpu.memory_space<vmem>>) attributes {dimension_semantics = [#tpu.dimension_semantics<parallel>], iteration_bounds = array<i64: 2>, scalar_prefetch = 0 : i64, scratch_operands = 0 : i64, tpu.core_type = #tpu.core_type<tc>, window_params = [{transform_indices = @transform_0, window_bounds = array<i64: 2, 8, 32>}, {transform_indices = @transform_1, window_bounds = array<i64: 2, 1, 8>}, {pipeline_mode = #tpu.pipeline_mode<synchronous>, transform_indices = @transform_2, window_bounds = array<i64: 8, 8>}, {pipeline_mode = #tpu.pipeline_mode<synchronous>, transform_indices = @transform_3, window_bounds = array<i64: 32, 32>}, {pipeline_mode = #tpu.pipeline_mode<synchronous>, transform_indices = @transform_4, window_bounds = array<i64: 8, 32>}, {pipeline_mode = #tpu.pipeline_mode<synchronous>, transform_indices = @transform_5, window_bounds = array<i64: 32, 32>}, {transform_indices = @transform_6, window_bounds = array<i64: 2, 8, 32>}, {transform_indices = @transform_7, window_bounds = array<i64: 2, 8, 8>}]} {
    %c0 = arith.constant 0 : index
    %c0_0 = arith.constant 0 : index
    %c0_1 = arith.constant 0 : index
    %0 = vector.load %arg1[%c0, %c0_0, %c0_1] : memref<2x8x32xf32, #tpu.memory_space<vmem>>, vector<2x8x32xf32>
    %c0_2 = arith.constant 0 : index
    %c0_3 = arith.constant 0 : index
    %c0_4 = arith.constant 0 : index
    %1 = vector.load %arg2[%c0_2, %c0_3, %c0_4] : memref<2x1x8xf32, #tpu.memory_space<vmem>>, vector<2x1x8xf32>
    %c0_5 = arith.constant 0 : index
    %c0_6 = arith.constant 0 : index
    %2 = vector.load %arg3[%c0_5, %c0_6] : memref<8x8xf32, #tpu.memory_space<vmem>>, vector<8x8xf32>
    %c0_7 = arith.constant 0 : index
    %c0_8 = arith.constant 0 : index
    %3 = vector.load %arg4[%c0_7, %c0_8] : memref<32x32xf32, #tpu.memory_space<vmem>>, vector<32x32xf32>
    %c0_9 = arith.constant 0 : index
    %c0_10 = arith.constant 0 : index
    %4 = vector.load %arg5[%c0_9, %c0_10] : memref<8x32xf32, #tpu.memory_space<vmem>>, vector<8x32xf32>
    %c0_11 = arith.constant 0 : index
    %c0_12 = arith.constant 0 : index
    %5 = vector.load %arg6[%c0_11, %c0_12] : memref<32x32xf32, #tpu.memory_space<vmem>>, vector<32x32xf32>
    %6 = vector.shape_cast %2 : vector<8x8xf32> to vector<1x8x8xf32>
    %7 = vector.broadcast %6 : vector<1x8x8xf32> to vector<2x8x8xf32>
    %cst = arith.constant dense<0.000000e+00> : vector<2x8x32xf32>
    %8 = tpu.matmul %7, %0, %cst {dimension_numbers = #tpu.dot_dimension_numbers<[2], [1], [1], [2], [0, 0, 0, 1, 1, 2], [0], [0]>} : vector<2x8x8xf32>, vector<2x8x32xf32>, vector<2x8x32xf32> -> vector<2x8x32xf32>
    %cst_13 = arith.constant 0.000000e+00 : f32
    %9 = vector.broadcast %cst_13 : f32 to vector<2x8x32xf32>
    %10 = arith.cmpf ogt, %8, %9 : vector<2x8x32xf32>
    %cst_14 = arith.constant 2.000000e-01 : f32
    %11 = vector.broadcast %cst_14 : f32 to vector<2x8x32xf32>
    %12 = arith.mulf %11, %8 : vector<2x8x32xf32>
    %13 = arith.select %10, %8, %12 : vector<2x8x32xi1>, vector<2x8x32xf32>
    %14 = vector.shape_cast %0 : vector<2x8x32xf32> to vector<16x32xf32>
    %15 = vector.shape_cast %13 : vector<2x8x32xf32> to vector<16x32xf32>
    %cst_15 = arith.constant dense<0.000000e+00> : vector<16x32xf32>
    %16 = tpu.matmul %15, %3, %cst_15 {dimension_numbers = #tpu.dot_dimension_numbers<[1], [0], [0], [1], [0, 0, 1, 1], [], []>} : vector<16x32xf32>, vector<32x32xf32>, vector<16x32xf32> -> vector<16x32xf32>
    %17 = arith.addf %14, %16 : vector<16x32xf32>
    %18 = vector.shape_cast %17 : vector<16x32xf32> to vector<2x8x32xf32>
    %cst_16 = arith.constant dense<0.000000e+00> : vector<16x8xf32>
    %19 = tpu.matmul %17, %4, %cst_16 {dimension_numbers = #tpu.dot_dimension_numbers<[1], [1], [0], [0], [0, 0, 1, 0], [], []>} : vector<16x32xf32>, vector<8x32xf32>, vector<16x8xf32> -> vector<16x8xf32>
    %20 = vector.shape_cast %19 : vector<16x8xf32> to vector<2x8x8xf32>
    %21 = vector.broadcast %1 : vector<2x1x8xf32> to vector<2x8x8xf32>
    %22 = arith.addf %20, %21 : vector<2x8x8xf32>
    %23 = arith.negf %22 : vector<2x8x8xf32>
    %24 = math.exp %23 : vector<2x8x8xf32>
    %cst_17 = arith.constant 1.000000e+00 : f32
    %25 = vector.broadcast %cst_17 : f32 to vector<2x8x8xf32>
    %26 = arith.addf %25, %24 : vector<2x8x8xf32>
    %27 = arith.divf %25, %26 : vector<2x8x8xf32>
    %c0_18 = arith.constant 0 : index
    %c0_19 = arith.constant 0 : index
    %c0_20 = arith.constant 0 : index
    %28 = vector.load %arg8[%c0_18, %c0_19, %c0_20] : memref<2x8x8xf32, #tpu.memory_space<vmem>>, vector<2x8x8xf32>
    tpu.vector_store %arg8[%c0_18, %c0_19, %c0_20], %27 {strides = array<i32>} : memref<2x8x8xf32, #tpu.memory_space<vmem>>, vector<2x8x8xf32>,
    %cst_21 = arith.constant dense<0.000000e+00> : vector<2x8xf32>
    %29 = vector.multi_reduction <add>, %27, %cst_21 [1] : vector<2x8x8xf32> to vector<2x8xf32>
    %30 = math.rsqrt %29 : vector<2x8xf32>
    %31 = vector.shape_cast %30 : vector<2x8xf32> to vector<2x8x1xf32>
    %32 = vector.broadcast %31 : vector<2x8x1xf32> to vector<2x8x8xf32>
    %33 = arith.mulf %32, %27 : vector<2x8x8xf32>
    %34 = vector.shape_cast %30 : vector<2x8xf32> to vector<2x1x8xf32>
    %35 = vector.broadcast %34 : vector<2x1x8xf32> to vector<2x8x8xf32>
    %36 = arith.mulf %33, %35 : vector<2x8x8xf32>
    %cst_22 = arith.constant dense<0.000000e+00> : vector<2x8x32xf32>
    %37 = tpu.matmul %36, %18, %cst_22 {dimension_numbers = #tpu.dot_dimension_numbers<[2], [1], [1], [2], [0, 0, 0, 1, 1, 2], [0], [0]>} : vector<2x8x8xf32>, vector<2x8x32xf32>, vector<2x8x32xf32> -> vector<2x8x32xf32>
    %cst_23 = arith.constant 0.000000e+00 : f32
    %38 = vector.broadcast %cst_23 : f32 to vector<2x8x32xf32>
    %39 = arith.cmpf ogt, %37, %38 : vector<2x8x32xf32>
    %cst_24 = arith.constant 2.000000e-01 : f32
    %40 = vector.broadcast %cst_24 : f32 to vector<2x8x32xf32>
    %41 = arith.mulf %40, %37 : vector<2x8x32xf32>
    %42 = arith.select %39, %37, %41 : vector<2x8x32xi1>, vector<2x8x32xf32>
    %43 = vector.shape_cast %42 : vector<2x8x32xf32> to vector<16x32xf32>
    %cst_25 = arith.constant dense<0.000000e+00> : vector<16x32xf32>
    %44 = tpu.matmul %43, %5, %cst_25 {dimension_numbers = #tpu.dot_dimension_numbers<[1], [0], [0], [1], [0, 0, 1, 1], [], []>} : vector<16x32xf32>, vector<32x32xf32>, vector<16x32xf32> -> vector<16x32xf32>
    %cst_26 = arith.constant 0.000000e+00 : f32
    %45 = vector.broadcast %cst_26 : f32 to vector<16x32xf32>
    %46 = arith.cmpf ogt, %44, %45 : vector<16x32xf32>
    %cst_27 = arith.constant 2.000000e-01 : f32
    %47 = vector.broadcast %cst_27 : f32 to vector<16x32xf32>
    %48 = arith.mulf %47, %44 : vector<16x32xf32>
    %49 = arith.select %46, %44, %48 : vector<16x32xi1>, vector<16x32xf32>
    %50 = vector.shape_cast %49 : vector<16x32xf32> to vector<2x8x32xf32>
    %c0_28 = arith.constant 0 : index
    %c0_29 = arith.constant 0 : index
    %c0_30 = arith.constant 0 : index
    %51 = vector.load %arg7[%c0_28, %c0_29, %c0_30] : memref<2x8x32xf32, #tpu.memory_space<vmem>>, vector<2x8x32xf32>
    tpu.vector_store %arg7[%c0_28, %c0_29, %c0_30], %50 {strides = array<i32>} : memref<2x8x32xf32, #tpu.memory_space<vmem>>, vector<2x8x32xf32>,
    return
  }
  func.func @transform_0(%arg0: i32) -> (i32, i32, i32) {
    %c0_i32 = arith.constant 0 : i32
    %c0_i32_0 = arith.constant 0 : i32
    %c0_i32_1 = arith.constant 0 : i32
    return %arg0, %c0_i32, %c0_i32_0 : i32, i32, i32
  }
  func.func @transform_1(%arg0: i32) -> (i32, i32, i32) {
    %c0_i32 = arith.constant 0 : i32
    %c0_i32_0 = arith.constant 0 : i32
    %c0_i32_1 = arith.constant 0 : i32
    return %arg0, %c0_i32, %c0_i32_0 : i32, i32, i32
  }
  func.func @transform_2(%arg0: i32) -> (i32, i32) {
    %c0_i32 = arith.constant 0 : i32
    %c0_i32_0 = arith.constant 0 : i32
    %c0_i32_1 = arith.constant 0 : i32
    return %c0_i32, %c0_i32_0 : i32, i32
  }
  func.func @transform_3(%arg0: i32) -> (i32, i32) {
    %c0_i32 = arith.constant 0 : i32
    %c0_i32_0 = arith.constant 0 : i32
    %c0_i32_1 = arith.constant 0 : i32
    return %c0_i32, %c0_i32_0 : i32, i32
  }
  func.func @transform_4(%arg0: i32) -> (i32, i32) {
    %c0_i32 = arith.constant 0 : i32
    %c0_i32_0 = arith.constant 0 : i32
    %c0_i32_1 = arith.constant 0 : i32
    return %c0_i32, %c0_i32_0 : i32, i32
  }
  func.func @transform_5(%arg0: i32) -> (i32, i32) {
    %c0_i32 = arith.constant 0 : i32
    %c0_i32_0 = arith.constant 0 : i32
    %c0_i32_1 = arith.constant 0 : i32
    return %c0_i32, %c0_i32_0 : i32, i32
  }
  func.func @transform_6(%arg0: i32) -> (i32, i32, i32) {
    %c0_i32 = arith.constant 0 : i32
    %c0_i32_0 = arith.constant 0 : i32
    %c0_i32_1 = arith.constant 0 : i32
    return %arg0, %c0_i32, %c0_i32_0 : i32, i32, i32
  }
  func.func @transform_7(%arg0: i32) -> (i32, i32, i32) {
    %c0_i32 = arith.constant 0 : i32
    %c0_i32_0 = arith.constant 0 : i32
    %c0_i32_1 = arith.constant 0 : i32
    return %arg0, %c0_i32, %c0_i32_0 : i32, i32, i32
  }
}

</mosaic_0001>

<llo_original>
// kernel: tpu_custom_call.1
$region0: #{tpu_custom_call.1}
  #allocation0 [shape = 'u32[]', space=smem, size = 0x4, offset = 0x4, fixed_abs, tag = 'smem constant byte address 0x4 - core index']
  #allocation1 [shape = 'u32[144,128]{1,0:T(1,128)}', space=vmem, size = 0x12000, scoped, tag = 'internal scratch']
  %s0 = inlined_call_operand.hbm [shape: f32[4,8,32], index: 0, kind: input, shape index: {}]
  %s1 = inlined_call_operand.hbm [shape: f32[4,1,8], index: 1, kind: input, shape index: {}]
  %s2 = inlined_call_operand.hbm [shape: f32[8,8], index: 2, kind: input, shape index: {}]
  %s3 = inlined_call_operand.hbm [shape: f32[32,32], index: 3, kind: input, shape index: {}]
  %s4 = inlined_call_operand.vmem [shape: f32[8,32], index: 4, kind: input, shape index: {}]
  %s5 = inlined_call_operand.hbm [shape: f32[32,32], index: 5, kind: input, shape index: {}]
  %s6 = inlined_call_operand.hbm [shape: f32[4,8,32], index: 6, kind: output, shape index: {0}]
  %s7 = inlined_call_operand.hbm [shape: f32[4,8,8], index: 7, kind: output, shape index: {1}]
  %8 = xla_tuple %s6, %s7
  %s9 = sld [smem:[#allocation0]]
  $region85: #{tpu_custom_call.1} parent=0
    _
  %s11 = ssub.s32 1, %s9
  %s12 = scalar_select 0, %s11, %s9
  $region1: #{tpu_custom_call.1} parent=0
    #allocation2 [shape = 'u8[16384]{0}', space=vmem, size = 0x4000, scoped, tag = 'input window, operand 0']
    #allocation3 [shape = 's32[2]{0}', space=sflag, size = 0x8, scoped, tag = 'scoped memory for tpu_custom_call.1']
    #allocation4 [shape = 's32[2]{0}', space=sflag, size = 0x8, scoped, tag = 'scoped memory for tpu_custom_call.1']
    #allocation5 [shape = 'u8[2048]{0}', space=vmem, size = 0x800, scoped, tag = 'input window, operand 1']
    #allocation6 [shape = 's32[2]{0}', space=sflag, size = 0x8, scoped, tag = 'scoped memory for tpu_custom_call.1']
    #allocation7 [shape = 'u8[4096]{0}', space=vmem, size = 0x1000, scoped, tag = 'input window, operand 2, single buffered']
    #allocation8 [shape = 'u8[16384]{0}', space=vmem, size = 0x4000, scoped, tag = 'input window, operand 3, single buffered']
    #allocation9 [shape = 's32[1]{0}', space=sflag, size = 0x4, scoped, tag = 'scoped memory for tpu_custom_call.1']
    #allocation10 [shape = 'u8[16384]{0}', space=vmem, size = 0x4000, scoped, tag = 'input window, operand 5, single buffered']
    #allocation11 [shape = 'u8[16384]{0}', space=vmem, size = 0x4000, scoped, tag = 'output window, operand 0']
    #allocation12 [shape = 'u8[16384]{0}', space=vmem, size = 0x4000, scoped, tag = 'output window, operand 1']
    #allocation13 [shape = 's32[2]{0}', space=sflag, size = 0x8, scoped, tag = 'scoped memory for tpu_custom_call.1']
    %13 = vsyncpa [#allocation3], 0
    %s14 = scalar_lea.sflag [#allocation3], 1
    %15 = vsyncpa %s14, 0
    %16 = vsyncpa [#allocation6], 0
    %s17 = scalar_lea.sflag [#allocation6], 1
    %18 = vsyncpa %s17, 0
    %19 = vsyncpa [#allocation9], 0
    %20 = vsyncpa [#allocation4], 0
    %s21 = scalar_lea.sflag [#allocation4], 1
    %22 = vsyncpa %s21, 0
    %23 = vsyncpa [#allocation13], 0
    %s24 = scalar_lea.sflag [#allocation13], 1
    %25 = vsyncpa %s24, 0
    loop: start=0, step=1, limit=4
    $region2: #{tpu_custom_call.1} parent=1 // loop_pre_header
      _
    $region3: #{tpu_custom_call.1} parent=1 // loop_header
      %s27 = sphi 0, %s31
      %p28 = scmp.ge.s32.totalorder %s27, 4
      %s37 = sphi 0, %s39
      %s40 = sphi 0, %s37
      %s41 = sphi 0, %s40
      %s57 = sphi 0, %s41
      %s63 = sphi 0, %s65
      %s66 = sphi 0, %s63
      %s67 = sphi 0, %s66
      %s83 = sphi 0, %s67
      %s87 = sphi 0, %s87
      %s89 = sphi 0, %s87
      %s90 = sphi 0, %s89
      %s104 = sphi 0, %s90
      %s108 = sphi 0, %s108
      %s110 = sphi 0, %s108
      %s111 = sphi 0, %s110
      %s125 = sphi 0, %s111
      %s129 = sphi 0, %s129
      %s131 = sphi 0, %s129
      %s132 = sphi 0, %s131
      %s146 = sphi 0, %s132
      %s150 = sphi 0, %s150
      %s152 = sphi 0, %s150
      %s153 = sphi 0, %s152
      %s167 = sphi 0, %s153
      %s173 = sphi 0, %s175
      %s176 = sphi 0, %s173
      %s177 = sphi 0, %s176
      %s193 = sphi 0, %s177
      %s199 = sphi 0, %s201
      %s202 = sphi 0, %s199
      %s203 = sphi 0, %s202
      %s219 = sphi 0, %s203
    $region4: #{tpu_custom_call.1} parent=1 // loop_header_branch
      %30 = sbr.rel (%p28) target = $region8
    $region5: #{tpu_custom_call.1} parent=1 // loop_body
      %s32 = ssub.s32 %s27, 1
      %s33 = ssub.s32 %s27, 2
      %s34 = sadd.s32 %s27, 1
      %s35 = ssub.s32 %s27, %s34
      %p36 = scmp.eq.s32.totalorder %s35, 0
      %s38 = sadd.s32 %s37, 1
      %s39 = scalar_select %p36, %s37, %s38
      %p42 = pneg %p36
      %p43 = scmp.eq.s32.totalorder %s27, 1
      %p44 = por %p42, %p43
      %p45 = scmp.ne.s32.totalorder %s37, %s40
      %p46 = scmp.eq.s32.totalorder %s27, 0
      %p47 = por %p45, %p46
      %p48 = scmp.ne.s32.totalorder %s37, %s40
      %p49 = scmp.eq.s32.totalorder %s32, 1
      %p50 = por %p48, %p49
      %p51 = scmp.ne.s32.totalorder %s40, %s41
      %p52 = scmp.eq.s32.totalorder %s32, 0
      %p53 = por %p51, %p52
      %p54 = scmp.ne.s32.totalorder %s40, %s41
      %p55 = scmp.eq.s32.totalorder %s33, 1
      %p56 = por %p54, %p55
      %p58 = scmp.ne.s32.totalorder %s41, %s57
      %p59 = scmp.eq.s32.totalorder %s33, 0
      %p60 = por %p58, %p59
      %s61 = ssub.s32 %s27, %s34
      %p62 = scmp.eq.s32.totalorder %s61, 0
      %s64 = sadd.s32 %s63, 1
      %s65 = scalar_select %p62, %s63, %s64
      %p68 = pneg %p62
      %p69 = scmp.eq.s32.totalorder %s27, 1
      %p70 = por %p68, %p69
      %p71 = scmp.ne.s32.totalorder %s63, %s66
      %p72 = scmp.eq.s32.totalorder %s27, 0
      %p73 = por %p71, %p72
      %p74 = scmp.ne.s32.totalorder %s63, %s66
      %p75 = scmp.eq.s32.totalorder %s32, 1
      %p76 = por %p74, %p75
      %p77 = scmp.ne.s32.totalorder %s66, %s67
      %p78 = scmp.eq.s32.totalorder %s32, 0
      %p79 = por %p77, %p78
      %p80 = scmp.ne.s32.totalorder %s66, %s67
      %p81 = scmp.eq.s32.totalorder %s33, 1
      %p82 = por %p80, %p81
      %p84 = scmp.ne.s32.totalorder %s67, %s83
      %p85 = scmp.eq.s32.totalorder %s33, 0
      %p86 = por %p84, %p85
      %s88 = sadd.s32 %s87, 1
      %p91 = scmp.eq.s32.totalorder %s27, 1
      %p92 = scmp.ne.s32.totalorder %s87, %s89
      %p93 = scmp.eq.s32.totalorder %s27, 0
      %p94 = por %p92, %p93
      %p95 = scmp.ne.s32.totalorder %s87, %s89
      %p96 = scmp.eq.s32.totalorder %s32, 1
      %p97 = por %p95, %p96
      %p98 = scmp.ne.s32.totalorder %s89, %s90
      %p99 = scmp.eq.s32.totalorder %s32, 0
      %p100 = por %p98, %p99
      %p101 = scmp.ne.s32.totalorder %s89, %s90
      %p102 = scmp.eq.s32.totalorder %s33, 1
      %p103 = por %p101, %p102
      %p105 = scmp.ne.s32.totalorder %s90, %s104
      %p106 = scmp.eq.s32.totalorder %s33, 0
      %p107 = por %p105, %p106
      %s109 = sadd.s32 %s108, 1
      %p112 = scmp.eq.s32.totalorder %s27, 1
      %p113 = scmp.ne.s32.totalorder %s108, %s110
      %p114 = scmp.eq.s32.totalorder %s27, 0
      %p115 = por %p113, %p114
      %p116 = scmp.ne.s32.totalorder %s108, %s110
      %p117 = scmp.eq.s32.totalorder %s32, 1
      %p118 = por %p116, %p117
      %p119 = scmp.ne.s32.totalorder %s110, %s111
      %p120 = scmp.eq.s32.totalorder %s32, 0
      %p121 = por %p119, %p120
      %p122 = scmp.ne.s32.totalorder %s110, %s111
      %p123 = scmp.eq.s32.totalorder %s33, 1
      %p124 = por %p122, %p123
      %p126 = scmp.ne.s32.totalorder %s111, %s125
      %p127 = scmp.eq.s32.totalorder %s33, 0
      %p128 = por %p126, %p127
      %s130 = sadd.s32 %s129, 1
      %p133 = scmp.eq.s32.totalorder %s27, 1
      %p134 = scmp.ne.s32.totalorder %s129, %s131
      %p135 = scmp.eq.s32.totalorder %s27, 0
      %p136 = por %p134, %p135
      %p137 = scmp.ne.s32.totalorder %s129, %s131
      %p138 = scmp.eq.s32.totalorder %s32, 1
      %p139 = por %p137, %p138
      %p140 = scmp.ne.s32.totalorder %s131, %s132
      %p141 = scmp.eq.s32.totalorder %s32, 0
      %p142 = por %p140, %p141
      %p143 = scmp.ne.s32.totalorder %s131, %s132
      %p144 = scmp.eq.s32.totalorder %s33, 1
      %p145 = por %p143, %p144
      %p147 = scmp.ne.s32.totalorder %s132, %s146
      %p148 = scmp.eq.s32.totalorder %s33, 0
      %p149 = por %p147, %p148
      %s151 = sadd.s32 %s150, 1
      %p154 = scmp.eq.s32.totalorder %s27, 1
      %p155 = scmp.ne.s32.totalorder %s150, %s152
      %p156 = scmp.eq.s32.totalorder %s27, 0
      %p157 = por %p155, %p156
      %p158 = scmp.ne.s32.totalorder %s150, %s152
      %p159 = scmp.eq.s32.totalorder %s32, 1
      %p160 = por %p158, %p159
      %p161 = scmp.ne.s32.totalorder %s152, %s153
      %p162 = scmp.eq.s32.totalorder %s32, 0
      %p163 = por %p161, %p162
      %p164 = scmp.ne.s32.totalorder %s152, %s153
      %p165 = scmp.eq.s32.totalorder %s33, 1
      %p166 = por %p164, %p165
      %p168 = scmp.ne.s32.totalorder %s153, %s167
      %p169 = scmp.eq.s32.totalorder %s33, 0
      %p170 = por %p168, %p169
      %s171 = ssub.s32 %s27, %s34
      %p172 = scmp.eq.s32.totalorder %s171, 0
      %s174 = sadd.s32 %s173, 1
      %s175 = scalar_select %p172, %s173, %s174
      %p178 = pneg %p172
      %p179 = scmp.eq.s32.totalorder %s27, 1
      %p180 = por %p178, %p179
      %p181 = scmp.ne.s32.totalorder %s173, %s176
      %p182 = scmp.eq.s32.totalorder %s27, 0
      %p183 = por %p181, %p182
      %p184 = scmp.ne.s32.totalorder %s173, %s176
      %p185 = scmp.eq.s32.totalorder %s32, 1
      %p186 = por %p184, %p185
      %p187 = scmp.ne.s32.totalorder %s176, %s177
      %p188 = scmp.eq.s32.totalorder %s32, 0
      %p189 = por %p187, %p188
      %p190 = scmp.ne.s32.totalorder %s176, %s177
      %p191 = scmp.eq.s32.totalorder %s33, 1
      %p192 = por %p190, %p191
      %p194 = scmp.ne.s32.totalorder %s177, %s193
      %p195 = scmp.eq.s32.totalorder %s33, 0
      %p196 = por %p194, %p195
      %s197 = ssub.s32 %s27, %s34
      %p198 = scmp.eq.s32.totalorder %s197, 0
      %s200 = sadd.s32 %s199, 1
      %s201 = scalar_select %p198, %s199, %s200
      %p204 = pneg %p198
      %p205 = scmp.eq.s32.totalorder %s27, 1
      %p206 = por %p204, %p205
      %p207 = scmp.ne.s32.totalorder %s199, %s202
      %p208 = scmp.eq.s32.totalorder %s27, 0
      %p209 = por %p207, %p208
      %p210 = scmp.ne.s32.totalorder %s199, %s202
      %p211 = scmp.eq.s32.totalorder %s32, 1
      %p212 = por %p210, %p211
      %p213 = scmp.ne.s32.totalorder %s202, %s203
      %p214 = scmp.eq.s32.totalorder %s32, 0
      %p215 = por %p213, %p214
      %p216 = scmp.ne.s32.totalorder %s202, %s203
      %p217 = scmp.eq.s32.totalorder %s33, 1
      %p218 = por %p216, %p217
      %p220 = scmp.ne.s32.totalorder %s203, %s219
      %p221 = scmp.eq.s32.totalorder %s33, 0
      %p222 = por %p220, %p221
      %p223 = scmp.le.s32.totalorder 1, %s27
      %p224 = scmp.lt.s32.totalorder %s27, 3
      %p225 = pnand %p223, %p224
      %p226 = pneg %p225
      // Predicated region
      $region9: #{tpu_custom_call.1} parent=5 // pred_check
        _
      $region10: #{tpu_custom_call.1} parent=5 // pred_check_branch
        %228 = sbr.rel (%p225) target = $region12
      $region11: #{tpu_custom_call.1} parent=5 // pred_region
        %s229 = ssub.s32 %s27, 1
        // Predicated region
        $region13: #{tpu_custom_call.1} parent=11 // pred_check
          %p230 = pneg %p100
        $region14: #{tpu_custom_call.1} parent=11 // pred_check_branch
          %232 = sbr.rel (%p230) target = $region16
        $region15: #{tpu_custom_call.1} parent=11 // pred_region
          %s234 = ssub.s32 128, 128
          %235 = vsyncadd [#allocation6], %s234
          %s237 = sshll.u32 [#allocation7], 4
          %s238 = int_to_ptr.vmem [resolvable:$true] %s237
          %240 = dma.hbm_to_vmem [thread:$0]  %s2, 128, %s238, [#allocation6]
        $region16: #{tpu_custom_call.1} parent=11 // pred_fallthru
          _
        // Predicated region
        $region17: #{tpu_custom_call.1} parent=11 // pred_check
          %p241 = pneg %p121
        $region18: #{tpu_custom_call.1} parent=11 // pred_check_branch
          %243 = sbr.rel (%p241) target = $region20
        $region19: #{tpu_custom_call.1} parent=11 // pred_region
          %s245 = ssub.s32 512, 512
          %246 = vsyncadd [#allocation9], %s245
          %s247 = sshll.u32 [#allocation8], 4
          %s248 = int_to_ptr.vmem [resolvable:$true] %s247
          %253 = dma.hbm_to_vmem [thread:$0]  %s3, 512, %s248, [#allocation9], 128, 128, 8
        $region20: #{tpu_custom_call.1} parent=11 // pred_fallthru
          _
        // Predicated region
        $region21: #{tpu_custom_call.1} parent=11 // pred_check
          %p254 = pneg %p142
        $region22: #{tpu_custom_call.1} parent=11 // pred_check_branch
          %256 = sbr.rel (%p254) target = $region24
        $region23: #{tpu_custom_call.1} parent=11 // pred_region
          _
        $region24: #{tpu_custom_call.1} parent=11 // pred_fallthru
          _
        // Predicated region
        $region25: #{tpu_custom_call.1} parent=11 // pred_check
          %p257 = pneg %p163
        $region26: #{tpu_custom_call.1} parent=11 // pred_check_branch
          %259 = sbr.rel (%p257) target = $region28
        $region27: #{tpu_custom_call.1} parent=11 // pred_region
          %s261 = ssub.s32 512, 512
          %262 = vsyncadd [#allocation9], %s261
          %s263 = sshll.u32 [#allocation10], 4
          %s264 = int_to_ptr.vmem [resolvable:$true] %s263
          %269 = dma.hbm_to_vmem [thread:$0]  %s5, 512, %s264, [#allocation9], 128, 128, 8
        $region28: #{tpu_custom_call.1} parent=11 // pred_fallthru
          _
      $region12: #{tpu_custom_call.1} parent=5 // pred_fallthru
        _
      %p270 = scmp.lt.s32.totalorder %s27, 2
      // Predicated region
      $region29: #{tpu_custom_call.1} parent=5 // pred_check
        %p271 = pneg %p270
      $region30: #{tpu_custom_call.1} parent=5 // pred_check_branch
        %273 = sbr.rel (%p271) target = $region32
      $region31: #{tpu_custom_call.1} parent=5 // pred_region
        // Predicated region
        $region33: #{tpu_custom_call.1} parent=31 // pred_check
          %p274 = pneg %p47
        $region34: #{tpu_custom_call.1} parent=31 // pred_check_branch
          %276 = sbr.rel (%p274) target = $region36
        $region35: #{tpu_custom_call.1} parent=31 // pred_region
          %s277 = sand.u32 %s37, 1
          %s278 = scalar_lea.sflag [#allocation3], %s277
          %s279 = sand.u32 %s37, 1
          %s280 = smul.addr %s279, 16
          %s281 = scalar_lea.vmem [#allocation2], %s280
          %s282 = smul.u32 2, %s27
          %s284 = ssub.s32 256, 256
          %285 = vsyncadd %s278, %s284
          %s286 = smul.addr %s282, 128
          %s287 = scalar_lea.hbm %s0, %s286
          %s288 = sshll.u32 %s281, 4
          %s289 = int_to_ptr.vmem [resolvable:$true] %s288
          %294 = dma.hbm_to_vmem [thread:$0]  %s287, 256, %s289, %s278, 128, 128, 8
        $region36: #{tpu_custom_call.1} parent=31 // pred_fallthru
          _
        // Predicated region
        $region37: #{tpu_custom_call.1} parent=31 // pred_check
          %p295 = pneg %p73
        $region38: #{tpu_custom_call.1} parent=31 // pred_check_branch
          %297 = sbr.rel (%p295) target = $region40
        $region39: #{tpu_custom_call.1} parent=31 // pred_region
          %s298 = sand.u32 %s27, 1
          %s299 = scalar_lea.sflag [#allocation6], %s298
          %s300 = sand.u32 %s63, 1
          %s301 = smul.addr %s300, 2
          %s302 = scalar_lea.vmem [#allocation5], %s301
          %s303 = smul.u32 2, %s27
          %s305 = ssub.s32 32, 32
          %306 = vsyncadd %s299, %s305
          %s307 = smul.addr %s303, 16
          %s308 = scalar_lea.hbm %s1, %s307
          %s309 = sshll.u32 %s302, 4
          %s310 = int_to_ptr.vmem [resolvable:$true] %s309
          %315 = dma.hbm_to_vmem [thread:$0]  %s308, 32, %s310, %s299, 16, 16, 1
        $region40: #{tpu_custom_call.1} parent=31 // pred_fallthru
          _
      $region32: #{tpu_custom_call.1} parent=5 // pred_fallthru
        _
      %p316 = scmp.le.s32.totalorder 1, %s27
      %p317 = scmp.lt.s32.totalorder %s27, 3
      %p318 = pnand %p316, %p317
      %p319 = pneg %p318
      // Predicated region
      $region41: #{tpu_custom_call.1} parent=5 // pred_check
        _
      $region42: #{tpu_custom_call.1} parent=5 // pred_check_branch
        %321 = sbr.rel (%p318) target = $region44
      $region43: #{tpu_custom_call.1} parent=5 // pred_region
        %s322 = ssub.s32 %s27, 1
        %s323 = sand.u32 %s40, 1
        %s324 = scalar_lea.sflag [#allocation3], %s323
        %s325 = sand.u32 %s40, 1
        %s326 = smul.addr %s325, 16
        %s327 = scalar_lea.vmem [#allocation2], %s326
        // Predicated region
        $region45: #{tpu_custom_call.1} parent=43 // pred_check
          %p328 = pneg %p53
        $region46: #{tpu_custom_call.1} parent=43 // pred_check_branch
          %330 = sbr.rel (%p328) target = $region48
        $region47: #{tpu_custom_call.1} parent=43 // pred_region
          %331 = dma.done %s324, 256
        $region48: #{tpu_custom_call.1} parent=43 // pred_fallthru
          _
        %s332 = sand.u32 %s32, 1
        %s333 = scalar_lea.sflag [#allocation6], %s332
        %s334 = sand.u32 %s66, 1
        %s335 = smul.addr %s334, 2
        %s336 = scalar_lea.vmem [#allocation5], %s335
        // Predicated region
        $region49: #{tpu_custom_call.1} parent=43 // pred_check
          %p337 = pneg %p79
        $region50: #{tpu_custom_call.1} parent=43 // pred_check_branch
          %339 = sbr.rel (%p337) target = $region52
        $region51: #{tpu_custom_call.1} parent=43 // pred_region
          %340 = dma.done %s333, 32
        $region52: #{tpu_custom_call.1} parent=43 // pred_fallthru
          _
        // Predicated region
        $region53: #{tpu_custom_call.1} parent=43 // pred_check
          %p341 = pneg %p100
        $region54: #{tpu_custom_call.1} parent=43 // pred_check_branch
          %343 = sbr.rel (%p341) target = $region56
        $region55: #{tpu_custom_call.1} parent=43 // pred_region
          %344 = dma.done [#allocation6], 128
        $region56: #{tpu_custom_call.1} parent=43 // pred_fallthru
          _
        // Predicated region
        $region57: #{tpu_custom_call.1} parent=43 // pred_check
          %p345 = pneg %p121
        $region58: #{tpu_custom_call.1} parent=43 // pred_check_branch
          %347 = sbr.rel (%p345) target = $region60
        $region59: #{tpu_custom_call.1} parent=43 // pred_region
          %348 = dma.done [#allocation9], 512
        $region60: #{tpu_custom_call.1} parent=43 // pred_fallthru
          _
        // Predicated region
        $region61: #{tpu_custom_call.1} parent=43 // pred_check
          %p349 = pneg %p163
        $region62: #{tpu_custom_call.1} parent=43 // pred_check_branch
          %351 = sbr.rel (%p349) target = $region64
        $region63: #{tpu_custom_call.1} parent=43 // pred_region
          %352 = dma.done [#allocation9], 512
        $region64: #{tpu_custom_call.1} parent=43 // pred_fallthru
          _
        %s353 = sand.u32 %s40, 1
        %s354 = scalar_lea.sflag [#allocation3], %s353
        %s355 = sand.u32 %s40, 1
        %s356 = smul.addr %s355, 16
        %s357 = scalar_lea.vmem [#allocation2], %s356
        %p358 = pneg %p53
        %p359 = pneg %p50
        %s360 = sand.u32 %s32, 1
        %s361 = scalar_lea.sflag [#allocation6], %s360
        %s362 = sand.u32 %s66, 1
        %s363 = smul.addr %s362, 2
        %s364 = scalar_lea.vmem [#allocation5], %s363
        %p365 = pneg %p79
        %p366 = pneg %p76
        %p367 = pneg %p100
        %p368 = pneg %p97
        %p369 = pneg %p121
        %p370 = pneg %p118
        %p371 = pneg %p142
        %p372 = pneg %p139
        %p373 = pneg %p163
        %p374 = pneg %p160
        %p375 = pneg %p189
        %p376 = pneg %p186
        %s377 = sand.u32 %s176, 1
        %s378 = scalar_lea.sflag [#allocation4], %s377
        %s379 = sand.u32 %s176, 1
        %s380 = smul.addr %s379, 16
        %s381 = scalar_lea.vmem [#allocation11], %s380
        %p382 = pneg %p215
        %p383 = pneg %p212
        %s384 = sand.u32 %s202, 1
        %s385 = scalar_lea.sflag [#allocation13], %s384
        %s386 = sand.u32 %s202, 1
        %s387 = smul.addr %s386, 16
        %s388 = scalar_lea.vmem [#allocation12], %s387
        %s389 = smul.u32 2, %s32
        %s390 = smul.u32 2, %s32
        %s391 = smul.u32 2, %s32
        %s392 = smul.u32 2, %s32
        %v393 = vld [vmem:[%s327] sm:$0xff]
        %v394 = vld [vmem:[%s327 + $0x8] sm:$0xff]
        %v395 = vld [vmem:[%s336] sm:$0x1]
        %v396 = vld [vmem:[%s336 + $0x1] sm:$0x1]
        %v397 = vld [vmem:[#allocation7] sm:$0xff]
        %v398 = vld [vmem:[#allocation8] sm:$0xff]
        %v399 = vld [vmem:[#allocation8 + $0x8] sm:$0xff]
        %v400 = vld [vmem:[#allocation8 + $0x10] sm:$0xff]
        %v401 = vld [vmem:[#allocation8 + $0x18] sm:$0xff]
        %v402 = vld [vmem:[%s4] sm:$0xff]
        %v403 = vld [vmem:[#allocation10] sm:$0xff]
        %v404 = vld [vmem:[#allocation10 + $0x8] sm:$0xff]
        %v405 = vld [vmem:[#allocation10 + $0x10] sm:$0xff]
        %v406 = vld [vmem:[#allocation10 + $0x18] sm:$0xff]
        %vm407 = vcmask 64512
        %v409 = vsel %vm407, %v397, 0
        %411 = vmatprep.subr.mxu0 0.0
        %412 = vmatpush1.msra.mxu0 %v393
        %413 = vmatprep.subr.mxu0 0.0
        %414 = vmatpush1.msra.mxu0 0.0
        %415 = vmatprep.subr.mxu0 0.0
        %416 = vmatpush1.msra.mxu0 0.0
        %417 = vmatprep.subr.mxu0 0.0
        %418 = vmatpush1.msra.mxu0 0.0
        %419 = vmatprep.subr.mxu0 0.0
        %420 = vmatpush1.msra.mxu0 0.0
        %421 = vmatprep.subr.mxu0 0.0
        %422 = vmatpush1.msra.mxu0 0.0
        %423 = vmatprep.subr.mxu0 0.0
        %424 = vmatpush1.msra.mxu0 0.0
        %425 = vmatprep.subr.mxu0 0.0
        %426 = vmatpush1.msra.mxu0 0.0
        %427 = vmatprep.subr.mxu0 0.0
        %428 = vmatpush1.msra.mxu0 0.0
        %429 = vmatprep.subr.mxu0 0.0
        %430 = vmatpush1.msra.mxu0 0.0
        %431 = vmatprep.subr.mxu0 0.0
        %432 = vmatpush1.msra.mxu0 0.0
        %433 = vmatprep.subr.mxu0 0.0
        %434 = vmatpush1.msra.mxu0 0.0
        %435 = vmatprep.subr.mxu0 0.0
        %436 = vmatpush1.msra.mxu0 0.0
        %437 = vmatprep.subr.mxu0 0.0
        %438 = vmatpush1.msra.mxu0 0.0
        %439 = vmatprep.subr.mxu0 0.0
        %440 = vmatpush1.msra.mxu0 0.0
        %441 = vmatprep.subr.mxu0 0.0
        %442 = vmatpush1.msra.mxu0 0.0
        %443 = vmatprep.subr.mxu0 0.0
        %444 = vmatpush1.msra.mxu0 0.0
        %445 = vmatprep.subr.mxu0 0.0
        %446 = vmatpush1.msra.mxu0 0.0
        %447 = vmatprep.subr.mxu0 0.0
        %448 = vmatpush1.msra.mxu0 0.0
        %449 = vmatprep.subr.mxu0 0.0
        %450 = vmatpush1.msra.mxu0 0.0
        %451 = vmatprep.subr.mxu0 0.0
        %452 = vmatpush1.msra.mxu0 0.0
        %453 = vmatprep.subr.mxu0 0.0
        %454 = vmatpush1.msra.mxu0 0.0
        %455 = vmatprep.subr.mxu0 0.0
        %456 = vmatpush1.msra.mxu0 0.0
        %457 = vmatprep.subr.mxu0 0.0
        %458 = vmatpush1.msra.mxu0 0.0
        %459 = vmatprep.subr.mxu0 0.0
        %460 = vmatpush1.msra.mxu0 0.0
        %461 = vmatprep.subr.mxu0 0.0
        %462 = vmatpush1.msra.mxu0 0.0
        %463 = vmatprep.subr.mxu0 0.0
        %464 = vmatpush1.msra.mxu0 0.0
        %465 = vmatprep.subr.mxu0 0.0
        %466 = vmatpush1.msra.mxu0 0.0
        %467 = vmatprep.subr.mxu0 0.0
        %468 = vmatpush1.msra.mxu0 0.0
        %469 = vmatprep.subr.mxu0 0.0
        %470 = vmatpush1.msra.mxu0 0.0
        %471 = vmatprep.subr.mxu0 0.0
        %472 = vmatpush1.msra.mxu0 0.0
        %473 = vmatprep.subr.mxu0 0.0
        %474 = vmatpush1.msra.mxu0 0.0
        %475 = vmatprep.mubr.f32.mxu0 0.0
        %476 = vmatmul.mubr.f32.gmra.mrb[0].mxu0 %v409
        %v477 = vpop.f32.mrb[0].mxu0
        %v478 = vadd.f32 0.0, %v477
        %v479 = vpop.f32.mrb[0].mxu0
        %480 = vdwg.mxu0
        %481 = vmatprep.subr.mxu0 0.0
        %482 = vmatpush1.msra.mxu0 %v394
        %483 = vmatprep.subr.mxu0 0.0
        %484 = vmatpush1.msra.mxu0 0.0
        %485 = vmatprep.subr.mxu0 0.0
        %486 = vmatpush1.msra.mxu0 0.0
        %487 = vmatprep.subr.mxu0 0.0
        %488 = vmatpush1.msra.mxu0 0.0
        %489 = vmatprep.subr.mxu0 0.0
        %490 = vmatpush1.msra.mxu0 0.0
        %491 = vmatprep.subr.mxu0 0.0
        %492 = vmatpush1.msra.mxu0 0.0
        %493 = vmatprep.subr.mxu0 0.0
        %494 = vmatpush1.msra.mxu0 0.0
        %495 = vmatprep.subr.mxu0 0.0
        %496 = vmatpush1.msra.mxu0 0.0
        %497 = vmatprep.subr.mxu0 0.0
        %498 = vmatpush1.msra.mxu0 0.0
        %499 = vmatprep.subr.mxu0 0.0
        %500 = vmatpush1.msra.mxu0 0.0
        %501 = vmatprep.subr.mxu0 0.0
        %502 = vmatpush1.msra.mxu0 0.0
        %503 = vmatprep.subr.mxu0 0.0
        %504 = vmatpush1.msra.mxu0 0.0
        %505 = vmatprep.subr.mxu0 0.0
        %506 = vmatpush1.msra.mxu0 0.0
        %507 = vmatprep.subr.mxu0 0.0
        %508 = vmatpush1.msra.mxu0 0.0
        %509 = vmatprep.subr.mxu0 0.0
        %510 = vmatpush1.msra.mxu0 0.0
        %511 = vmatprep.subr.mxu0 0.0
        %512 = vmatpush1.msra.mxu0 0.0
        %513 = vmatprep.subr.mxu0 0.0
        %514 = vmatpush1.msra.mxu0 0.0
        %515 = vmatprep.subr.mxu0 0.0
        %516 = vmatpush1.msra.mxu0 0.0
        %517 = vmatprep.subr.mxu0 0.0
        %518 = vmatpush1.msra.mxu0 0.0
        %519 = vmatprep.subr.mxu0 0.0
        %520 = vmatpush1.msra.mxu0 0.0
        %521 = vmatprep.subr.mxu0 0.0
        %522 = vmatpush1.msra.mxu0 0.0
        %523 = vmatprep.subr.mxu0 0.0
        %524 = vmatpush1.msra.mxu0 0.0
        %525 = vmatprep.subr.mxu0 0.0
        %526 = vmatpush1.msra.mxu0 0.0
        %527 = vmatprep.subr.mxu0 0.0
        %528 = vmatpush1.msra.mxu0 0.0
        %529 = vmatprep.subr.mxu0 0.0
        %530 = vmatpush1.msra.mxu0 0.0
        %531 = vmatprep.subr.mxu0 0.0
        %532 = vmatpush1.msra.mxu0 0.0
        %533 = vmatprep.subr.mxu0 0.0
        %534 = vmatpush1.msra.mxu0 0.0
        %535 = vmatprep.subr.mxu0 0.0
        %536 = vmatpush1.msra.mxu0 0.0
        %537 = vmatprep.subr.mxu0 0.0
        %538 = vmatpush1.msra.mxu0 0.0
        %539 = vmatprep.subr.mxu0 0.0
        %540 = vmatpush1.msra.mxu0 0.0
        %541 = vmatprep.subr.mxu0 0.0
        %542 = vmatpush1.msra.mxu0 0.0
        %543 = vmatprep.subr.mxu0 0.0
        %544 = vmatpush1.msra.mxu0 0.0
        %545 = vmatprep.mubr.f32.mxu0 0.0
        %546 = vmatmul.mubr.f32.gmra.mrb[0].mxu0 %v409
        %v547 = vpop.f32.mrb[0].mxu0
        %v548 = vadd.f32 0.0, %v547
        %v549 = vpop.f32.mrb[0].mxu0
        %550 = vdwg.mxu0
        %vm551 = vcmp.gt.f32.partialorder %v478, 0.0
        %vm552 = vcmp.gt.f32.partialorder %v548, 0.0
        %v553 = vmul.f32 %v478, 0.2
        %v554 = vmul.f32 %v548, 0.2
        %v555 = vsel %vm551, %v478, %v553
        %v556 = vsel %vm552, %v548, %v554
        %vm557 = vcmask 261120
        %v559 = vsel %vm557, %v555, 0
        %v562 = vsel %vm557, %v556, 0
        %564 = vmatprep.subr.mxu0 0.0
        %565 = vmatpush1.msra.mxu0 %v398
        %566 = vmatprep.subr.mxu0 0.0
        %567 = vmatpush1.msra.mxu0 %v399
        %568 = vmatprep.subr.mxu0 0.0
        %569 = vmatpush1.msra.mxu0 %v400
        %570 = vmatprep.subr.mxu0 0.0
        %571 = vmatpush1.msra.mxu0 %v401
        %572 = vmatprep.subr.mxu0 0.0
        %573 = vmatpush1.msra.mxu0 0.0
        %574 = vmatprep.subr.mxu0 0.0
        %575 = vmatpush1.msra.mxu0 0.0
        %576 = vmatprep.subr.mxu0 0.0
        %577 = vmatpush1.msra.mxu0 0.0
        %578 = vmatprep.subr.mxu0 0.0
        %579 = vmatpush1.msra.mxu0 0.0
        %580 = vmatprep.subr.mxu0 0.0
        %581 = vmatpush1.msra.mxu0 0.0
        %582 = vmatprep.subr.mxu0 0.0
        %583 = vmatpush1.msra.mxu0 0.0
        %584 = vmatprep.subr.mxu0 0.0
        %585 = vmatpush1.msra.mxu0 0.0
        %586 = vmatprep.subr.mxu0 0.0
        %587 = vmatpush1.msra.mxu0 0.0
        %588 = vmatprep.subr.mxu0 0.0
        %589 = vmatpush1.msra.mxu0 0.0
        %590 = vmatprep.subr.mxu0 0.0
        %591 = vmatpush1.msra.mxu0 0.0
        %592 = vmatprep.subr.mxu0 0.0
        %593 = vmatpush1.msra.mxu0 0.0
        %594 = vmatprep.subr.mxu0 0.0
        %595 = vmatpush1.msra.mxu0 0.0
        %596 = vmatprep.subr.mxu0 0.0
        %597 = vmatpush1.msra.mxu0 0.0
        %598 = vmatprep.subr.mxu0 0.0
        %599 = vmatpush1.msra.mxu0 0.0
        %600 = vmatprep.subr.mxu0 0.0
        %601 = vmatpush1.msra.mxu0 0.0
        %602 = vmatprep.subr.mxu0 0.0
        %603 = vmatpush1.msra.mxu0 0.0
        %604 = vmatprep.subr.mxu0 0.0
        %605 = vmatpush1.msra.mxu0 0.0
        %606 = vmatprep.subr.mxu0 0.0
        %607 = vmatpush1.msra.mxu0 0.0
        %608 = vmatprep.subr.mxu0 0.0
        %609 = vmatpush1.msra.mxu0 0.0
        %610 = vmatprep.subr.mxu0 0.0
        %611 = vmatpush1.msra.mxu0 0.0
        %612 = vmatprep.subr.mxu0 0.0
        %613 = vmatpush1.msra.mxu0 0.0
        %614 = vmatprep.subr.mxu0 0.0
        %615 = vmatpush1.msra.mxu0 0.0
        %616 = vmatprep.subr.mxu0 0.0
        %617 = vmatpush1.msra.mxu0 0.0
        %618 = vmatprep.subr.mxu0 0.0
        %619 = vmatpush1.msra.mxu0 0.0
        %620 = vmatprep.subr.mxu0 0.0
        %621 = vmatpush1.msra.mxu0 0.0
        %622 = vmatprep.subr.mxu0 0.0
        %623 = vmatpush1.msra.mxu0 0.0
        %624 = vmatprep.subr.mxu0 0.0
        %625 = vmatpush1.msra.mxu0 0.0
        %626 = vmatprep.subr.mxu0 0.0
        %627 = vmatpush1.msra.mxu0 0.0
        %628 = vmatprep.mubr.f32.mxu0 0.0
        %629 = vmatmul.mubr.f32.gmra.mrb[0].mxu0 %v559
        %v630 = vpop.f32.mrb[0].mxu0
        %v631 = vadd.f32 0.0, %v630
        %v632 = vpop.f32.mrb[0].mxu0
        %633 = vmatprep.mubr.f32.mxu0 0.0
        %634 = vmatmul.mubr.f32.gmra.mrb[0].mxu0 %v562
        %v635 = vpop.f32.mrb[0].mxu0
        %v636 = vadd.f32 0.0, %v635
        %v637 = vpop.f32.mrb[0].mxu0
        %638 = vdwg.mxu0
        %v639 = vadd.f32 %v393, %v631
        %v640 = vadd.f32 %v394, %v636
        %v642 = vsel %vm557, %v639, 0
        %v645 = vsel %vm557, %v640, 0
        %v648 = vsel %vm557, %v402, 0
        %650 = vmatprep.subr.mxu0 0.0
        %651 = vmatpush1.xpose.msra.mxu0 %v648
        %652 = vmatprep.subr.mxu0 0.0
        %653 = vmatpush1.xpose.msra.mxu0 0.0
        %654 = vmatprep.subr.mxu0 0.0
        %655 = vmatpush1.xpose.msra.mxu0 0.0
        %656 = vmatprep.subr.mxu0 0.0
        %657 = vmatpush1.xpose.msra.mxu0 0.0
        %658 = vmatprep.subr.mxu0 0.0
        %659 = vmatpush1.xpose.msra.mxu0 0.0
        %660 = vmatprep.subr.mxu0 0.0
        %661 = vmatpush1.xpose.msra.mxu0 0.0
        %662 = vmatprep.subr.mxu0 0.0
        %663 = vmatpush1.xpose.msra.mxu0 0.0
        %664 = vmatprep.subr.mxu0 0.0
        %665 = vmatpush1.xpose.msra.mxu0 0.0
        %666 = vmatprep.subr.mxu0 0.0
        %667 = vmatpush1.xpose.msra.mxu0 0.0
        %668 = vmatprep.subr.mxu0 0.0
        %669 = vmatpush1.xpose.msra.mxu0 0.0
        %670 = vmatprep.subr.mxu0 0.0
        %671 = vmatpush1.xpose.msra.mxu0 0.0
        %672 = vmatprep.subr.mxu0 0.0
        %673 = vmatpush1.xpose.msra.mxu0 0.0
        %674 = vmatprep.subr.mxu0 0.0
        %675 = vmatpush1.xpose.msra.mxu0 0.0
        %676 = vmatprep.subr.mxu0 0.0
        %677 = vmatpush1.xpose.msra.mxu0 0.0
        %678 = vmatprep.subr.mxu0 0.0
        %679 = vmatpush1.xpose.msra.mxu0 0.0
        %680 = vmatprep.subr.mxu0 0.0
        %681 = vmatpush1.xpose.msra.mxu0 0.0
        %682 = vmatprep.subr.mxu0 0.0
        %683 = vmatpush1.xpose.msra.mxu0 0.0
        %684 = vmatprep.subr.mxu0 0.0
        %685 = vmatpush1.xpose.msra.mxu0 0.0
        %686 = vmatprep.subr.mxu0 0.0
        %687 = vmatpush1.xpose.msra.mxu0 0.0
        %688 = vmatprep.subr.mxu0 0.0
        %689 = vmatpush1.xpose.msra.mxu0 0.0
        %690 = vmatprep.subr.mxu0 0.0
        %691 = vmatpush1.xpose.msra.mxu0 0.0
        %692 = vmatprep.subr.mxu0 0.0
        %693 = vmatpush1.xpose.msra.mxu0 0.0
        %694 = vmatprep.subr.mxu0 0.0
        %695 = vmatpush1.xpose.msra.mxu0 0.0
        %696 = vmatprep.subr.mxu0 0.0
        %697 = vmatpush1.xpose.msra.mxu0 0.0
        %698 = vmatprep.subr.mxu0 0.0
        %699 = vmatpush1.xpose.msra.mxu0 0.0
        %700 = vmatprep.subr.mxu0 0.0
        %701 = vmatpush1.xpose.msra.mxu0 0.0
        %702 = vmatprep.subr.mxu0 0.0
        %703 = vmatpush1.xpose.msra.mxu0 0.0
        %704 = vmatprep.subr.mxu0 0.0
        %705 = vmatpush1.xpose.msra.mxu0 0.0
        %706 = vmatprep.subr.mxu0 0.0
        %707 = vmatpush1.xpose.msra.mxu0 0.0
        %708 = vmatprep.subr.mxu0 0.0
        %709 = vmatpush1.xpose.msra.mxu0 0.0
        %710 = vmatprep.subr.mxu0 0.0
        %711 = vmatpush1.xpose.msra.mxu0 0.0
        %712 = vmatprep.subr.mxu0 0.0
        %713 = vmatpush1.xpose.msra.mxu0 0.0
        %714 = vmatprep.mubr.f32.mxu0 0.0
        %715 = vmatmul.mubr.f32.gmra.mrb[0].mxu0 %v642
        %v716 = vpop.f32.mrb[0].mxu0
        %v717 = vadd.f32 0.0, %v716
        %v718 = vpop.f32.mrb[0].mxu0
        %719 = vmatprep.mubr.f32.mxu0 0.0
        %720 = vmatmul.mubr.f32.gmra.mrb[0].mxu0 %v645
        %v721 = vpop.f32.mrb[0].mxu0
        %v722 = vadd.f32 0.0, %v721
        %v723 = vpop.f32.mrb[0].mxu0
        %724 = vdwg.mxu0
        %v727 = vlaneseq
        %v728 = vshrl.u32 %v727, 7
        %v729 = vsub.s32 0, %v728
        %v730 = vrot.slane %v395, %v729
        %v731 = vlaneseq
        %v732 = vshrl.u32 %v731, 7
        %v733 = vsub.s32 0, %v732
        %v734 = vrot.slane %v396, %v733
        %v737 = vadd.f32 %v717, %v730
        %v738 = vadd.f32 %v722, %v734
        %v739 = vxor.u32 %v737, 2147483648
        %v740 = vxor.u32 %v738, 2147483648
        %v741 = vmul.f32 %v739, 1.442695
        %v742 = vpow.pop %v741
        %v743 = vmul.f32 %v740, 1.442695
        %v744 = vpow.pop %v743
        %v745 = vadd.f32 %v742, 1.0
        %v746 = vadd.f32 %v744, 1.0
        %v747 = vrcp.pop %v745
        %v748 = vmul.f32 1.0, %v747
        %v749 = vrcp.pop %v746
        %v750 = vmul.f32 1.0, %v749
        %751 = vst.msk [vmem:[%s388] sm:$0xff] %vm407, %v748
        %752 = vst.msk [vmem:[%s388 + $0x8] sm:$0xff] %vm407, %v750
        %v753 = vsel %vm407, %v748, 0.0
        %v754 = vrot.slane %v753, 4
        %v755 = vadd.f32 %v753, %v754
        %v756 = vrot.slane %v755, 2
        %v757 = vadd.f32 %v755, %v756
        %v758 = vrot.slane %v757, 1
        %v759 = vadd.f32 %v757, %v758
        %v760 = vsel %vm407, %v750, 0.0
        %v761 = vrot.slane %v760, 4
        %v762 = vadd.f32 %v760, %v761
        %v763 = vrot.slane %v762, 2
        %v764 = vadd.f32 %v762, %v763
        %v765 = vrot.slane %v764, 1
        %v766 = vadd.f32 %v764, %v765
        %v767 = vrsqrt.pop %v759
        %v768 = vrsqrt.pop %v766
        %770 = vbcast.lane.b32.xlu0 %v767, 256
        %v771 = vpop.permute.xlu0 %770
        %773 = vbcast.lane.b32.xlu0 %v768, 256
        %v774 = vpop.permute.xlu0 %773
        %v775 = vmul.f32 %v771, %v748
        %v776 = vmul.f32 %v774, %v750
        %v777 = vmul.f32 %v775, %v767
        %v778 = vmul.f32 %v776, %v768
        %v780 = vsel %vm407, %v777, 0
        %782 = vmatprep.subr.mxu0 0.0
        %783 = vmatpush1.msra.mxu0 %v639
        %784 = vmatprep.subr.mxu0 0.0
        %785 = vmatpush1.msra.mxu0 0.0
        %786 = vmatprep.subr.mxu0 0.0
        %787 = vmatpush1.msra.mxu0 0.0
        %788 = vmatprep.subr.mxu0 0.0
        %789 = vmatpush1.msra.mxu0 0.0
        %790 = vmatprep.subr.mxu0 0.0
        %791 = vmatpush1.msra.mxu0 0.0
        %792 = vmatprep.subr.mxu0 0.0
        %793 = vmatpush1.msra.mxu0 0.0
        %794 = vmatprep.subr.mxu0 0.0
        %795 = vmatpush1.msra.mxu0 0.0
        %796 = vmatprep.subr.mxu0 0.0
        %797 = vmatpush1.msra.mxu0 0.0
        %798 = vmatprep.subr.mxu0 0.0
        %799 = vmatpush1.msra.mxu0 0.0
        %800 = vmatprep.subr.mxu0 0.0
        %801 = vmatpush1.msra.mxu0 0.0
        %802 = vmatprep.subr.mxu0 0.0
        %803 = vmatpush1.msra.mxu0 0.0
        %804 = vmatprep.subr.mxu0 0.0
        %805 = vmatpush1.msra.mxu0 0.0
        %806 = vmatprep.subr.mxu0 0.0
        %807 = vmatpush1.msra.mxu0 0.0
        %808 = vmatprep.subr.mxu0 0.0
        %809 = vmatpush1.msra.mxu0 0.0
        %810 = vmatprep.subr.mxu0 0.0
        %811 = vmatpush1.msra.mxu0 0.0
        %812 = vmatprep.subr.mxu0 0.0
        %813 = vmatpush1.msra.mxu0 0.0
        %814 = vmatprep.subr.mxu0 0.0
        %815 = vmatpush1.msra.mxu0 0.0
        %816 = vmatprep.subr.mxu0 0.0
        %817 = vmatpush1.msra.mxu0 0.0
        %818 = vmatprep.subr.mxu0 0.0
        %819 = vmatpush1.msra.mxu0 0.0
        %820 = vmatprep.subr.mxu0 0.0
        %821 = vmatpush1.msra.mxu0 0.0
        %822 = vmatprep.subr.mxu0 0.0
        %823 = vmatpush1.msra.mxu0 0.0
        %824 = vmatprep.subr.mxu0 0.0
        %825 = vmatpush1.msra.mxu0 0.0
        %826 = vmatprep.subr.mxu0 0.0
        %827 = vmatpush1.msra.mxu0 0.0
        %828 = vmatprep.subr.mxu0 0.0
        %829 = vmatpush1.msra.mxu0 0.0
        %830 = vmatprep.subr.mxu0 0.0
        %831 = vmatpush1.msra.mxu0 0.0
        %832 = vmatprep.subr.mxu0 0.0
        %833 = vmatpush1.msra.mxu0 0.0
        %834 = vmatprep.subr.mxu0 0.0
        %835 = vmatpush1.msra.mxu0 0.0
        %836 = vmatprep.subr.mxu0 0.0
        %837 = vmatpush1.msra.mxu0 0.0
        %838 = vmatprep.subr.mxu0 0.0
        %839 = vmatpush1.msra.mxu0 0.0
        %840 = vmatprep.subr.mxu0 0.0
        %841 = vmatpush1.msra.mxu0 0.0
        %842 = vmatprep.subr.mxu0 0.0
        %843 = vmatpush1.msra.mxu0 0.0
        %844 = vmatprep.subr.mxu0 0.0
        %845 = vmatpush1.msra.mxu0 0.0
        %846 = vmatprep.mubr.f32.mxu0 0.0
        %847 = vmatmul.mubr.f32.gmra.mrb[0].mxu0 %v780
        %v848 = vpop.f32.mrb[0].mxu0
        %v849 = vadd.f32 0.0, %v848
        %v850 = vpop.f32.mrb[0].mxu0
        %851 = vdwg.mxu0
        %v853 = vsel %vm407, %v778, 0
        %855 = vmatprep.subr.mxu0 0.0
        %856 = vmatpush1.msra.mxu0 %v640
        %857 = vmatprep.subr.mxu0 0.0
        %858 = vmatpush1.msra.mxu0 0.0
        %859 = vmatprep.subr.mxu0 0.0
        %860 = vmatpush1.msra.mxu0 0.0
        %861 = vmatprep.subr.mxu0 0.0
        %862 = vmatpush1.msra.mxu0 0.0
        %863 = vmatprep.subr.mxu0 0.0
        %864 = vmatpush1.msra.mxu0 0.0
        %865 = vmatprep.subr.mxu0 0.0
        %866 = vmatpush1.msra.mxu0 0.0
        %867 = vmatprep.subr.mxu0 0.0
        %868 = vmatpush1.msra.mxu0 0.0
        %869 = vmatprep.subr.mxu0 0.0
        %870 = vmatpush1.msra.mxu0 0.0
        %871 = vmatprep.subr.mxu0 0.0
        %872 = vmatpush1.msra.mxu0 0.0
        %873 = vmatprep.subr.mxu0 0.0
        %874 = vmatpush1.msra.mxu0 0.0
        %875 = vmatprep.subr.mxu0 0.0
        %876 = vmatpush1.msra.mxu0 0.0
        %877 = vmatprep.subr.mxu0 0.0
        %878 = vmatpush1.msra.mxu0 0.0
        %879 = vmatprep.subr.mxu0 0.0
        %880 = vmatpush1.msra.mxu0 0.0
        %881 = vmatprep.subr.mxu0 0.0
        %882 = vmatpush1.msra.mxu0 0.0
        %883 = vmatprep.subr.mxu0 0.0
        %884 = vmatpush1.msra.mxu0 0.0
        %885 = vmatprep.subr.mxu0 0.0
        %886 = vmatpush1.msra.mxu0 0.0
        %887 = vmatprep.subr.mxu0 0.0
        %888 = vmatpush1.msra.mxu0 0.0
        %889 = vmatprep.subr.mxu0 0.0
        %890 = vmatpush1.msra.mxu0 0.0
        %891 = vmatprep.subr.mxu0 0.0
        %892 = vmatpush1.msra.mxu0 0.0
        %893 = vmatprep.subr.mxu0 0.0
        %894 = vmatpush1.msra.mxu0 0.0
        %895 = vmatprep.subr.mxu0 0.0
        %896 = vmatpush1.msra.mxu0 0.0
        %897 = vmatprep.subr.mxu0 0.0
        %898 = vmatpush1.msra.mxu0 0.0
        %899 = vmatprep.subr.mxu0 0.0
        %900 = vmatpush1.msra.mxu0 0.0
        %901 = vmatprep.subr.mxu0 0.0
        %902 = vmatpush1.msra.mxu0 0.0
        %903 = vmatprep.subr.mxu0 0.0
        %904 = vmatpush1.msra.mxu0 0.0
        %905 = vmatprep.subr.mxu0 0.0
        %906 = vmatpush1.msra.mxu0 0.0
        %907 = vmatprep.subr.mxu0 0.0
        %908 = vmatpush1.msra.mxu0 0.0
        %909 = vmatprep.subr.mxu0 0.0
        %910 = vmatpush1.msra.mxu0 0.0
        %911 = vmatprep.subr.mxu0 0.0
        %912 = vmatpush1.msra.mxu0 0.0
        %913 = vmatprep.subr.mxu0 0.0
        %914 = vmatpush1.msra.mxu0 0.0
        %915 = vmatprep.subr.mxu0 0.0
        %916 = vmatpush1.msra.mxu0 0.0
        %917 = vmatprep.subr.mxu0 0.0
        %918 = vmatpush1.msra.mxu0 0.0
        %919 = vmatprep.mubr.f32.mxu0 0.0
        %920 = vmatmul.mubr.f32.gmra.mrb[0].mxu0 %v853
        %v921 = vpop.f32.mrb[0].mxu0
        %v922 = vadd.f32 0.0, %v921
        %v923 = vpop.f32.mrb[0].mxu0
        %924 = vdwg.mxu0
        %vm925 = vcmp.gt.f32.partialorder %v849, 0.0
        %vm926 = vcmp.gt.f32.partialorder %v922, 0.0
        %v927 = vmul.f32 %v849, 0.2
        %v928 = vmul.f32 %v922, 0.2
        %v929 = vsel %vm925, %v849, %v927
        %v930 = vsel %vm926, %v922, %v928
        %v932 = vsel %vm557, %v929, 0
        %v935 = vsel %vm557, %v930, 0
        %937 = vmatprep.subr.mxu0 0.0
        %938 = vmatpush1.msra.mxu0 %v403
        %939 = vmatprep.subr.mxu0 0.0
        %940 = vmatpush1.msra.mxu0 %v404
        %941 = vmatprep.subr.mxu0 0.0
        %942 = vmatpush1.msra.mxu0 %v405
        %943 = vmatprep.subr.mxu0 0.0
        %944 = vmatpush1.msra.mxu0 %v406
        %945 = vmatprep.subr.mxu0 0.0
        %946 = vmatpush1.msra.mxu0 0.0
        %947 = vmatprep.subr.mxu0 0.0
        %948 = vmatpush1.msra.mxu0 0.0
        %949 = vmatprep.subr.mxu0 0.0
        %950 = vmatpush1.msra.mxu0 0.0
        %951 = vmatprep.subr.mxu0 0.0
        %952 = vmatpush1.msra.mxu0 0.0
        %953 = vmatprep.subr.mxu0 0.0
        %954 = vmatpush1.msra.mxu0 0.0
        %955 = vmatprep.subr.mxu0 0.0
        %956 = vmatpush1.msra.mxu0 0.0
        %957 = vmatprep.subr.mxu0 0.0
        %958 = vmatpush1.msra.mxu0 0.0
        %959 = vmatprep.subr.mxu0 0.0
        %960 = vmatpush1.msra.mxu0 0.0
        %961 = vmatprep.subr.mxu0 0.0
        %962 = vmatpush1.msra.mxu0 0.0
        %963 = vmatprep.subr.mxu0 0.0
        %964 = vmatpush1.msra.mxu0 0.0
        %965 = vmatprep.subr.mxu0 0.0
        %966 = vmatpush1.msra.mxu0 0.0
        %967 = vmatprep.subr.mxu0 0.0
        %968 = vmatpush1.msra.mxu0 0.0
        %969 = vmatprep.subr.mxu0 0.0
        %970 = vmatpush1.msra.mxu0 0.0
        %971 = vmatprep.subr.mxu0 0.0
        %972 = vmatpush1.msra.mxu0 0.0
        %973 = vmatprep.subr.mxu0 0.0
        %974 = vmatpush1.msra.mxu0 0.0
        %975 = vmatprep.subr.mxu0 0.0
        %976 = vmatpush1.msra.mxu0 0.0
        %977 = vmatprep.subr.mxu0 0.0
        %978 = vmatpush1.msra.mxu0 0.0
        %979 = vmatprep.subr.mxu0 0.0
        %980 = vmatpush1.msra.mxu0 0.0
        %981 = vmatprep.subr.mxu0 0.0
        %982 = vmatpush1.msra.mxu0 0.0
        %983 = vmatprep.subr.mxu0 0.0
        %984 = vmatpush1.msra.mxu0 0.0
        %985 = vmatprep.subr.mxu0 0.0
        %986 = vmatpush1.msra.mxu0 0.0
        %987 = vmatprep.subr.mxu0 0.0
        %988 = vmatpush1.msra.mxu0 0.0
        %989 = vmatprep.subr.mxu0 0.0
        %990 = vmatpush1.msra.mxu0 0.0
        %991 = vmatprep.subr.mxu0 0.0
        %992 = vmatpush1.msra.mxu0 0.0
        %993 = vmatprep.subr.mxu0 0.0
        %994 = vmatpush1.msra.mxu0 0.0
        %995 = vmatprep.subr.mxu0 0.0
        %996 = vmatpush1.msra.mxu0 0.0
        %997 = vmatprep.subr.mxu0 0.0
        %998 = vmatpush1.msra.mxu0 0.0
        %999 = vmatprep.subr.mxu0 0.0
        %1000 = vmatpush1.msra.mxu0 0.0
        %1001 = vmatprep.mubr.f32.mxu0 0.0
        %1002 = vmatmul.mubr.f32.gmra.mrb[0].mxu0 %v932
        %v1003 = vpop.f32.mrb[0].mxu0
        %v1004 = vadd.f32 0.0, %v1003
        %v1005 = vpop.f32.mrb[0].mxu0
        %1006 = vmatprep.mubr.f32.mxu0 0.0
        %1007 = vmatmul.mubr.f32.gmra.mrb[0].mxu0 %v935
        %v1008 = vpop.f32.mrb[0].mxu0
        %v1009 = vadd.f32 0.0, %v1008
        %v1010 = vpop.f32.mrb[0].mxu0
        %1011 = vdwg.mxu0
        %vm1012 = vcmp.gt.f32.partialorder %v1004, 0.0
        %vm1013 = vcmp.gt.f32.partialorder %v1009, 0.0
        %v1014 = vmul.f32 %v1004, 0.2
        %v1015 = vmul.f32 %v1009, 0.2
        %v1016 = vsel %vm1012, %v1004, %v1014
        %v1017 = vsel %vm1013, %v1009, %v1015
        %1018 = vst.msk [vmem:[%s381] sm:$0xff] %vm557, %v1016
        %1019 = vst.msk [vmem:[%s381 + $0x8] sm:$0xff] %vm557, %v1017
        %s1020 = sand.u32 %s176, 1
        %s1021 = scalar_lea.sflag [#allocation4], %s1020
        %s1022 = sand.u32 %s176, 1
        %s1023 = smul.addr %s1022, 16
        %s1024 = scalar_lea.vmem [#allocation11], %s1023
        %s1025 = sand.u32 %s202, 1
        %s1026 = scalar_lea.sflag [#allocation13], %s1025
        %s1027 = sand.u32 %s202, 1
        %s1028 = smul.addr %s1027, 16
        %s1029 = scalar_lea.vmem [#allocation12], %s1028
        // Predicated region
        $region65: #{tpu_custom_call.1} parent=43 // pred_check
          %p1030 = pneg %p186
        $region66: #{tpu_custom_call.1} parent=43 // pred_check_branch
          %1032 = sbr.rel (%p1030) target = $region68
        $region67: #{tpu_custom_call.1} parent=43 // pred_region
          %s1033 = smul.u32 2, %s32
          %s1035 = ssub.s32 256, 256
          %1036 = vsyncadd %s1021, %s1035
          %s1037 = smul.addr %s1033, 128
          %s1038 = scalar_lea.hbm %s6, %s1037
          %s1039 = sshll.u32 %s1024, 4
          %s1040 = int_to_ptr.vmem [resolvable:$true] %s1039
          %1045 = dma.vmem_to_hbm [thread:$0]  %s1040, 256, %s1038, %s1021, 128, 128, 8
        $region68: #{tpu_custom_call.1} parent=43 // pred_fallthru
          _
        // Predicated region
        $region69: #{tpu_custom_call.1} parent=43 // pred_check
          %p1046 = pneg %p212
        $region70: #{tpu_custom_call.1} parent=43 // pred_check_branch
          %1048 = sbr.rel (%p1046) target = $region72
        $region71: #{tpu_custom_call.1} parent=43 // pred_region
          %s1049 = smul.u32 2, %s32
          %s1051 = ssub.s32 256, 256
          %1052 = vsyncadd %s1026, %s1051
          %s1053 = smul.addr %s1049, 128
          %s1054 = scalar_lea.hbm %s7, %s1053
          %s1055 = sshll.u32 %s1029, 4
          %s1056 = int_to_ptr.vmem [resolvable:$true] %s1055
          %1061 = dma.vmem_to_hbm [thread:$0]  %s1056, 256, %s1054, %s1026, 128, 128, 8
        $region72: #{tpu_custom_call.1} parent=43 // pred_fallthru
          _
      $region44: #{tpu_custom_call.1} parent=5 // pred_fallthru
        _
      %p1062 = scmp.le.s32.totalorder 2, %s27
      // Predicated region
      $region73: #{tpu_custom_call.1} parent=5 // pred_check
        %p1063 = pneg %p1062
      $region74: #{tpu_custom_call.1} parent=5 // pred_check_branch
        %1065 = sbr.rel (%p1063) target = $region76
      $region75: #{tpu_custom_call.1} parent=5 // pred_region
        %s1066 = ssub.s32 %s27, 2
        // Predicated region
        $region77: #{tpu_custom_call.1} parent=75 // pred_check
          %p1067 = pneg %p192
        $region78: #{tpu_custom_call.1} parent=75 // pred_check_branch
          %1069 = sbr.rel (%p1067) target = $region80
        $region79: #{tpu_custom_call.1} parent=75 // pred_region
          %s1070 = sand.u32 %s177, 1
          %s1071 = scalar_lea.sflag [#allocation4], %s1070
          %s1072 = sand.u32 %s177, 1
          %s1073 = smul.addr %s1072, 16
          %s1074 = scalar_lea.vmem [#allocation11], %s1073
          %1075 = dma.done %s1071, 256
        $region80: #{tpu_custom_call.1} parent=75 // pred_fallthru
          _
        // Predicated region
        $region81: #{tpu_custom_call.1} parent=75 // pred_check
          %p1076 = pneg %p218
        $region82: #{tpu_custom_call.1} parent=75 // pred_check_branch
          %1078 = sbr.rel (%p1076) target = $region84
        $region83: #{tpu_custom_call.1} parent=75 // pred_region
          %s1079 = sand.u32 %s203, 1
          %s1080 = scalar_lea.sflag [#allocation13], %s1079
          %s1081 = sand.u32 %s203, 1
          %s1082 = smul.addr %s1081, 16
          %s1083 = scalar_lea.vmem [#allocation12], %s1082
          %1084 = dma.done %s1080, 256
        $region84: #{tpu_custom_call.1} parent=75 // pred_fallthru
          _
      $region76: #{tpu_custom_call.1} parent=5 // pred_fallthru
        _
    $region6: #{tpu_custom_call.1} parent=1 // loop_footer
      %s31 = sadd.s32 1, %s27
    $region7: #{tpu_custom_call.1} parent=1 // loop_footer_branch
      %26 = sbr.rel target = $region3
    $region8: #{tpu_custom_call.1} parent=1 // loop_exit
      _
    %1085 = vsyncpa [#allocation3], 1
    %s1086 = scalar_lea.sflag [#allocation3], 1
    %1087 = vsyncpa %s1086, 1
    %1088 = vsyncpa [#allocation6], 1
    %s1089 = scalar_lea.sflag [#allocation6], 1
    %1090 = vsyncpa %s1089, 1
    %1091 = vsyncpa [#allocation9], 1
    %1092 = vsyncpa [#allocation4], 1
    %s1093 = scalar_lea.sflag [#allocation4], 1
    %1094 = vsyncpa %s1093, 1
    %1095 = vsyncpa [#allocation13], 1
    %s1096 = scalar_lea.sflag [#allocation13], 1
    %1097 = vsyncpa %s1096, 1

</llo_original>
